<compile_context>
chip_gen: v7x
topology: tpu7x:2x2x1
jax: 0.10.0
libtpu: 0.0.40
codegen_flags: <defaults>
</compile_context>

<pallas_src>
import jax
import jax.numpy as jnp
from jax import lax
from jax.experimental import pallas as pl
from jax.experimental.pallas import tpu as pltpu


EPS = 1e-6


def _cdiv(a, b):
    return -(-a // b)


def _round_up(x, m):
    return ((x + m - 1) // m) * m


def _head_kernel(x_ref, g_ref, b_ref, w_ref, bias_ref, o_ref):
    # x_ref: [TM, D] token rows; g/b: [1, D] LayerNorm affine;
    # w_ref: [D, TC] pre-transposed head weight; bias_ref: [1, TC].
    x = x_ref[...].astype(jnp.float32)

    # LayerNorm over last dim (eps=1e-6, biased variance), stats in f32.
    mean = jnp.mean(x, axis=-1, keepdims=True)
    xc = x - mean
    var = jnp.mean(xc * xc, axis=-1, keepdims=True)
    xn = xc * lax.rsqrt(var + EPS)
    xn = xn * g_ref[...].astype(jnp.float32) + b_ref[...].astype(jnp.float32)

    # head_drop: nn.Dropout is identity at inference time.
    # TODO(synk): training-mode dropout (scaled Bernoulli mask) not implemented.

    # head: feed the MXU in the weight dtype, accumulate in f32.  Weight is
    # already [D, TC], so no in-kernel transpose is needed.
    out = jnp.dot(xn.astype(w_ref.dtype), w_ref[...],
                  preferred_element_type=jnp.float32)
    out = out + bias_ref[...].astype(jnp.float32)
    o_ref[...] = out.astype(o_ref.dtype)


def _fc_norm_jax(x, gamma, beta):
    xf = x.astype(jnp.float32)
    mean = jnp.mean(xf, axis=-1, keepdims=True)
    xc = xf - mean
    var = jnp.mean(xc * xc, axis=-1, keepdims=True)
    xn = xc * lax.rsqrt(var + EPS) * gamma.astype(jnp.float32) + beta.astype(jnp.float32)
    return xn.astype(x.dtype)


def _pick_tiles(M, D, C, x_bytes, w_bytes, o_bytes):
    """Generation-aware tile sizes + VMEM limit."""
    try:
        vmem_cap = int(pltpu.get_tpu_info().vmem_capacity_bytes)
    except Exception:
        vmem_cap = 64 * 2**20                       # conservative (v7x-sized)
    small_vmem = vmem_cap <= 64 * 2**20             # v7x: 64 MiB per TC, 2 TCs
    budget = (40 if small_vmem else 96) * 2**20     # v5e/v6e: 128 MiB physical

    # Row tile past each generation's ridge (v5e ~240, v7x ~311, v6e ~640 flop/B).
    tm_target = 512 if small_vmem else 1024
    TM = min(tm_target, _round_up(M, 8))
    TC = C if C < 128 else min(1024, _round_up(C, 128))   # lane-dense class tile

    def est(tm_, tc_):
        return (2 * tm_ * D * x_bytes          # double-buffered x tile
                + 2 * D * tc_ * w_bytes        # double-buffered weight tile
                + 2 * tm_ * tc_ * o_bytes      # double-buffered output tile
                + 2 * tm_ * D * 4              # f32 LN temporaries (x, xn)
                + tm_ * tc_ * 4                # f32 matmul accumulator
                + 4 * D * 4 + 2 * tc_ * 4)     # gamma/beta/bias

    # Shrink tiles until they fit the per-generation VMEM budget.
    while est(TM, TC) > budget and (TM > 8 or TC > 128):
        tm_dep = TM * (2 * D * x_bytes + 2 * TC * o_bytes + 2 * D * 4 + TC * 4)
        tc_dep = 2 * D * TC * w_bytes
        if tm_dep >= tc_dep and TM > 8:
            TM = max(8, _round_up(TM // 2, 8))
        elif TC > 128:
            TC = max(128, _round_up(TC // 2, 128))
        else:
            TM = max(8, _round_up(TM // 2, 8))

    # v7x megacore: ensure the grid has >= 2 cells so both TensorCores get work.
    if small_vmem and _cdiv(M, TM) * _cdiv(C, TC) == 1:
        if TC >= 256:
            TC = max(128, _round_up(TC // 2, 128))
        elif TM >= 16:
            TM = max(8, _round_up(TM // 2, 8))

    vmem_limit = int(min(max(int(1.5 * est(TM, TC)), 16 * 2**20), budget))
    return TM, TC, vmem_limit


def finetune_vit_head(x, gamma, beta, w, bias, *, global_pool=False,
                      num_prefix_tokens=1, pre_logits=False):
    """Forward pass of FinetuneVisionTransformer's head.

    x: [B, N, D] (or [B, D] if already pooled)
    gamma, beta: [D]            (fc_norm params)
    w: [num_classes, D]         (PyTorch nn.Linear weight layout)
    bias: [num_classes]
    """
    if global_pool:
        # TODO(synk): timm pool modes 'max'/'avgmax'/'map' are not supported.
        if global_pool == 'avg':
            x = x[:, num_prefix_tokens:].mean(axis=1)        # [B, D]
        else:
            x = x[:, 0]                                      # [B, D]

    D = x.shape[-1]

    # pre_logits=True returns fc_norm'ed features -> skip the head kernel.
    if pre_logits:
        return _fc_norm_jax(x, gamma, beta)

    C = int(w.shape[0])
    if C == 0:                                               # head == nn.Identity()
        return _fc_norm_jax(x, gamma, beta)

    lead = x.shape[:-1]
    x2d = x.reshape(-1, D)                                   # [M, D]
    M = x2d.shape[0]

    x_bytes = jnp.dtype(x.dtype).itemsize
    w_bytes = jnp.dtype(w.dtype).itemsize
    TM, TC, vmem_limit = _pick_tiles(M, D, C, x_bytes, w_bytes, x_bytes)
    n_m, n_c = _cdiv(M, TM), _cdiv(C, TC)

    # One-time [C, D] -> [D, C] transpose so the kernel never transposes a tile.
    w_t = jnp.transpose(w)                                   # [D, C]
    g2d = gamma.reshape(1, D)
    b2d = beta.reshape(1, D)
    bias2d = bias.reshape(1, C)

    # Grid order: stream the larger operand from HBM exactly once.
    #   m-major (C innermost): x read once, weight read n_m times.
    #   c-major (M innermost): weight read once, x read n_c times.
    m_major = (M * D * x_bytes + n_m * C * D * w_bytes
               <= C * D * w_bytes + n_c * M * D * x_bytes)
    if m_major:
        grid = (n_m, n_c)
        mi = lambda i, j: i
        ci = lambda i, j: j
    else:
        grid = (n_c, n_m)
        mi = lambda i, j: j
        ci = lambda i, j: i

    out2d = pl.pallas_call(
        _head_kernel,
        out_shape=jax.ShapeDtypeStruct((M, C), x.dtype),
        grid=grid,
        in_specs=[
            pl.BlockSpec((TM, D), lambda i, j: (mi(i, j), 0)),   # token rows
            pl.BlockSpec((1, D), lambda i, j: (0, 0)),           # gamma (resident)
            pl.BlockSpec((1, D), lambda i, j: (0, 0)),           # beta  (resident)
            pl.BlockSpec((D, TC), lambda i, j: (0, ci(i, j))),   # weight [D, TC]
            pl.BlockSpec((1, TC), lambda i, j: (0, ci(i, j))),   # bias tile
        ],
        out_specs=pl.BlockSpec((TM, TC), lambda i, j: (mi(i, j), ci(i, j))),
        compiler_params=pltpu.CompilerParams(
            dimension_semantics=("parallel", "parallel"),
            vmem_limit_bytes=vmem_limit,
        ),
    )(x2d, g2d, b2d, w_t, bias2d)

    return out2d.reshape(lead + (C,))


def _reference(x, gamma, beta, w, bias):
    mean = jnp.mean(x, axis=-1, keepdims=True)
    xc = x - mean
    var = jnp.mean(xc * xc, axis=-1, keepdims=True)
    xn = xc * lax.rsqrt(var + EPS) * gamma + beta
    return xn @ w.T + bias


if __name__ == "__main__":
    # Small synthetic config consistent with the module: embed_dim=32, num_classes=16.
    B, N, D, C = 2, 8, 32, 16
    key = jax.random.PRNGKey(0)
    kx, kw, kb = jax.random.split(key, 3)

    x = jax.random.normal(kx, (B, N, D), dtype=jnp.float32)

    # fc_norm (nn.LayerNorm) default init: weight=1, bias=0.
    gamma = jnp.ones((D,), dtype=jnp.float32)
    beta = jnp.zeros((D,), dtype=jnp.float32)

    # head (nn.Linear): deterministic uniform init, PyTorch layout [C, D].
    limit = 1.0 / jnp.sqrt(jnp.float32(D))
    w = jax.random.uniform(kw, (C, D), minval=-limit, maxval=limit, dtype=jnp.float32)
    bias = jax.random.uniform(kb, (C,), minval=-limit, maxval=limit, dtype=jnp.float32)

    out = finetune_vit_head(x, gamma, beta, w, bias)
    out = jax.block_until_ready(out)

    ref = _reference(x, gamma, beta, w, bias)
    assert out.shape == (B, N, C)
    assert jnp.allclose(out, ref, atol=1e-4, rtol=1e-4)

    # pre_logits path skips the head kernel and returns fc_norm(x).
    feats = jax.block_until_ready(
        finetune_vit_head(x, gamma, beta, w, bias, pre_logits=True))
    assert feats.shape == (B, N, D)
    assert jnp.allclose(feats, _fc_norm_jax(x, gamma, beta), atol=1e-5, rtol=1e-5)

    print("KERNEL_OK")
</pallas_src>

<mosaic_0001>
module attributes {stable_mosaic.version = 11 : i64} {
  func.func @_head_kernel(%arg0: i32, %arg1: i32, %arg2: memref<8x32xf32, #tpu.memory_space<vmem>>, %arg3: memref<1x32xf32, #tpu.memory_space<vmem>>, %arg4: memref<1x32xf32, #tpu.memory_space<vmem>>, %arg5: memref<32x16xf32, #tpu.memory_space<vmem>>, %arg6: memref<1x16xf32, #tpu.memory_space<vmem>>, %arg7: memref<8x16xf32, #tpu.memory_space<vmem>>) attributes {dimension_semantics = [#tpu.dimension_semantics<parallel>, #tpu.dimension_semantics<parallel>], iteration_bounds = array<i64: 1, 2>, scalar_prefetch = 0 : i64, scratch_operands = 0 : i64, tpu.core_type = #tpu.core_type<tc>, window_params = [{transform_indices = @transform_0, window_bounds = array<i64: 8, 32>}, {pipeline_mode = #tpu.pipeline_mode<synchronous>, transform_indices = @transform_1, window_bounds = array<i64: 1, 32>}, {pipeline_mode = #tpu.pipeline_mode<synchronous>, transform_indices = @transform_2, window_bounds = array<i64: 1, 32>}, {transform_indices = @transform_3, window_bounds = array<i64: 32, 16>}, {transform_indices = @transform_4, window_bounds = array<i64: 1, 16>}, {transform_indices = @transform_5, window_bounds = array<i64: 8, 16>}]} {
    %c0 = arith.constant 0 : index
    %c0_0 = arith.constant 0 : index
    %0 = vector.load %arg2[%c0, %c0_0] : memref<8x32xf32, #tpu.memory_space<vmem>>, vector<8x32xf32>
    %cst = arith.constant dense<0.000000e+00> : vector<8xf32>
    %1 = vector.multi_reduction <add>, %0, %cst [1] : vector<8x32xf32> to vector<8xf32>
    %2 = vector.shape_cast %1 : vector<8xf32> to vector<8x1xf32>
    %cst_1 = arith.constant 3.200000e+01 : f32
    %3 = vector.broadcast %cst_1 : f32 to vector<8x1xf32>
    %4 = arith.divf %2, %3 : vector<8x1xf32>
    %5 = vector.broadcast %4 : vector<8x1xf32> to vector<8x32xf32>
    %6 = arith.subf %0, %5 : vector<8x32xf32>
    %7 = arith.mulf %6, %6 : vector<8x32xf32>
    %cst_2 = arith.constant dense<0.000000e+00> : vector<8xf32>
    %8 = vector.multi_reduction <add>, %7, %cst_2 [1] : vector<8x32xf32> to vector<8xf32>
    %9 = vector.shape_cast %8 : vector<8xf32> to vector<8x1xf32>
    %cst_3 = arith.constant 3.200000e+01 : f32
    %10 = vector.broadcast %cst_3 : f32 to vector<8x1xf32>
    %11 = arith.divf %9, %10 : vector<8x1xf32>
    %cst_4 = arith.constant 9.99999997E-7 : f32
    %12 = vector.broadcast %cst_4 : f32 to vector<8x1xf32>
    %13 = arith.addf %11, %12 : vector<8x1xf32>
    %14 = math.rsqrt %13 : vector<8x1xf32>
    %15 = vector.broadcast %14 : vector<8x1xf32> to vector<8x32xf32>
    %16 = arith.mulf %6, %15 : vector<8x32xf32>
    %c0_5 = arith.constant 0 : index
    %c0_6 = arith.constant 0 : index
    %17 = vector.load %arg3[%c0_5, %c0_6] : memref<1x32xf32, #tpu.memory_space<vmem>>, vector<1x32xf32>
    %18 = vector.broadcast %17 : vector<1x32xf32> to vector<8x32xf32>
    %19 = arith.mulf %16, %18 : vector<8x32xf32>
    %c0_7 = arith.constant 0 : index
    %c0_8 = arith.constant 0 : index
    %20 = vector.load %arg4[%c0_7, %c0_8] : memref<1x32xf32, #tpu.memory_space<vmem>>, vector<1x32xf32>
    %21 = vector.broadcast %20 : vector<1x32xf32> to vector<8x32xf32>
    %22 = arith.addf %19, %21 : vector<8x32xf32>
    %c0_9 = arith.constant 0 : index
    %c0_10 = arith.constant 0 : index
    %23 = vector.load %arg5[%c0_9, %c0_10] : memref<32x16xf32, #tpu.memory_space<vmem>>, vector<32x16xf32>
    %cst_11 = arith.constant dense<0.000000e+00> : vector<8x16xf32>
    %24 = tpu.matmul %22, %23, %cst_11 {dimension_numbers = #tpu.dot_dimension_numbers<[1], [0], [0], [1], [0, 0, 1, 1], [], []>} : vector<8x32xf32>, vector<32x16xf32>, vector<8x16xf32> -> vector<8x16xf32>
    %c0_12 = arith.constant 0 : index
    %c0_13 = arith.constant 0 : index
    %25 = vector.load %arg6[%c0_12, %c0_13] : memref<1x16xf32, #tpu.memory_space<vmem>>, vector<1x16xf32>
    %26 = vector.broadcast %25 : vector<1x16xf32> to vector<8x16xf32>
    %27 = arith.addf %24, %26 : vector<8x16xf32>
    %c0_14 = arith.constant 0 : index
    %c0_15 = arith.constant 0 : index
    %28 = vector.load %arg7[%c0_14, %c0_15] : memref<8x16xf32, #tpu.memory_space<vmem>>, vector<8x16xf32>
    tpu.vector_store %arg7[%c0_14, %c0_15], %27 {strides = array<i32>} : memref<8x16xf32, #tpu.memory_space<vmem>>, vector<8x16xf32>,
    return
  }
  func.func @transform_0(%arg0: i32, %arg1: i32) -> (i32, i32) {
    %c0_i32 = arith.constant 0 : i32
    %c0_i32_0 = arith.constant 0 : i32
    return %arg1, %c0_i32 : i32, i32
  }
  func.func @transform_1(%arg0: i32, %arg1: i32) -> (i32, i32) {
    %c0_i32 = arith.constant 0 : i32
    %c0_i32_0 = arith.constant 0 : i32
    %c0_i32_1 = arith.constant 0 : i32
    return %c0_i32, %c0_i32_0 : i32, i32
  }
  func.func @transform_2(%arg0: i32, %arg1: i32) -> (i32, i32) {
    %c0_i32 = arith.constant 0 : i32
    %c0_i32_0 = arith.constant 0 : i32
    %c0_i32_1 = arith.constant 0 : i32
    return %c0_i32, %c0_i32_0 : i32, i32
  }
  func.func @transform_3(%arg0: i32, %arg1: i32) -> (i32, i32) {
    %c0_i32 = arith.constant 0 : i32
    %c0_i32_0 = arith.constant 0 : i32
    return %c0_i32, %arg0 : i32, i32
  }
  func.func @transform_4(%arg0: i32, %arg1: i32) -> (i32, i32) {
    %c0_i32 = arith.constant 0 : i32
    %c0_i32_0 = arith.constant 0 : i32
    return %c0_i32, %arg0 : i32, i32
  }
  func.func @transform_5(%arg0: i32, %arg1: i32) -> (i32, i32) {
    %c0_i32 = arith.constant 0 : i32
    return %arg1, %arg0 : i32, i32
  }
}

</mosaic_0001>

<llo_original>
// kernel: tpu_custom_call.1
$region0: #{tpu_custom_call.1}
  #allocation0 [shape = 'u32[]', space=smem, size = 0x4, offset = 0x4, fixed_abs, tag = 'smem constant byte address 0x4 - core index']
  #allocation1 [shape = 'u32[144,128]{1,0:T(1,128)}', space=vmem, size = 0x12000, scoped, tag = 'internal scratch']
  %s0 = inlined_call_operand.vmem [shape: f32[16,32], index: 0, kind: input, shape index: {}]
  %s1 = inlined_call_operand.vmem [shape: f32[1,32], index: 1, kind: input, shape index: {}]
  %s2 = inlined_call_operand.vmem [shape: f32[1,32], index: 2, kind: input, shape index: {}]
  %s3 = inlined_call_operand.vmem [shape: f32[32,16], index: 3, kind: input, shape index: {}]
  %s4 = inlined_call_operand.vmem [shape: f32[1,16], index: 4, kind: input, shape index: {}]
  %s5 = inlined_call_operand.hbm [shape: f32[16,16], index: 5, kind: output, shape index: {}]
  %s6 = sld [smem:[#allocation0]]
  $region53: #{tpu_custom_call.1} parent=0
    _
  %s8 = ssub.s32 1, %s6
  %s9 = scalar_select 0, %s8, %s6
  $region1: #{tpu_custom_call.1} parent=0
    #allocation2 [shape = 'u8[8192]{0}', space=vmem, size = 0x2000, scoped, tag = 'output window, operand 0']
    #allocation3 [shape = 's32[2]{0}', space=sflag, size = 0x8, scoped, tag = 'scoped memory for tpu_custom_call.1']
    %10 = vsyncpa [#allocation3], 0
    %s11 = scalar_lea.sflag [#allocation3], 1
    %12 = vsyncpa %s11, 0
    loop: start=0, step=1, limit=4
    $region2: #{tpu_custom_call.1} parent=1 // loop_pre_header
      _
    $region3: #{tpu_custom_call.1} parent=1 // loop_header
      %s14 = sphi 0, %s18
      %p15 = scmp.ge.s32.totalorder %s14, 4
      %s21 = sphi 0, %s33
      %s22 = sphi 0, %s29
      %s23 = sphi 0, %s21
      %s24 = sphi 0, %s22
      %s25 = sphi 0, %s23
      %s26 = sphi 0, %s24
      %s36 = sphi 0, %s38
      %s39 = sphi 0, %s36
      %s40 = sphi 0, %s39
      %s56 = sphi 0, %s40
      %s60 = sphi 0, %s60
      %s62 = sphi 0, %s60
      %s63 = sphi 0, %s62
      %s77 = sphi 0, %s63
      %s81 = sphi 0, %s81
      %s83 = sphi 0, %s81
      %s84 = sphi 0, %s83
      %s98 = sphi 0, %s84
      %s104 = sphi 0, %s106
      %s107 = sphi 0, %s104
      %s108 = sphi 0, %s107
      %s124 = sphi 0, %s108
      %s130 = sphi 0, %s132
      %s133 = sphi 0, %s130
      %s134 = sphi 0, %s133
      %s150 = sphi 0, %s134
      %s158 = sphi 0, %s160
      %s161 = sphi 0, %s158
      %s162 = sphi 0, %s161
      %s178 = sphi 0, %s162
    $region4: #{tpu_custom_call.1} parent=1 // loop_header_branch
      %17 = sbr.rel (%p15) target = $region8
    $region5: #{tpu_custom_call.1} parent=1 // loop_body
      %s19 = ssub.s32 %s14, 1
      %s20 = ssub.s32 %s14, 2
      %s27 = sadd.s32 1, %s22
      %p28 = scmp.ge.s32.totalorder %s27, 2
      %s29 = scalar_select %p28, 0, %s27
      %s30 = sadd.s32 1, %s21
      %s31 = scalar_select %p28, %s30, %s21
      %p32 = scmp.ge.s32.totalorder %s31, 1
      %s33 = scalar_select %p32, 0, %s31
      %s34 = ssub.s32 %s22, %s29
      %p35 = scmp.eq.s32.totalorder %s34, 0
      %s37 = sadd.s32 %s36, 1
      %s38 = scalar_select %p35, %s36, %s37
      %p41 = pneg %p35
      %p42 = scmp.eq.s32.totalorder %s14, 1
      %p43 = por %p41, %p42
      %p44 = scmp.ne.s32.totalorder %s36, %s39
      %p45 = scmp.eq.s32.totalorder %s14, 0
      %p46 = por %p44, %p45
      %p47 = scmp.ne.s32.totalorder %s36, %s39
      %p48 = scmp.eq.s32.totalorder %s19, 1
      %p49 = por %p47, %p48
      %p50 = scmp.ne.s32.totalorder %s39, %s40
      %p51 = scmp.eq.s32.totalorder %s19, 0
      %p52 = por %p50, %p51
      %p53 = scmp.ne.s32.totalorder %s39, %s40
      %p54 = scmp.eq.s32.totalorder %s20, 1
      %p55 = por %p53, %p54
      %p57 = scmp.ne.s32.totalorder %s40, %s56
      %p58 = scmp.eq.s32.totalorder %s20, 0
      %p59 = por %p57, %p58
      %s61 = sadd.s32 %s60, 1
      %p64 = scmp.eq.s32.totalorder %s14, 1
      %p65 = scmp.ne.s32.totalorder %s60, %s62
      %p66 = scmp.eq.s32.totalorder %s14, 0
      %p67 = por %p65, %p66
      %p68 = scmp.ne.s32.totalorder %s60, %s62
      %p69 = scmp.eq.s32.totalorder %s19, 1
      %p70 = por %p68, %p69
      %p71 = scmp.ne.s32.totalorder %s62, %s63
      %p72 = scmp.eq.s32.totalorder %s19, 0
      %p73 = por %p71, %p72
      %p74 = scmp.ne.s32.totalorder %s62, %s63
      %p75 = scmp.eq.s32.totalorder %s20, 1
      %p76 = por %p74, %p75
      %p78 = scmp.ne.s32.totalorder %s63, %s77
      %p79 = scmp.eq.s32.totalorder %s20, 0
      %p80 = por %p78, %p79
      %s82 = sadd.s32 %s81, 1
      %p85 = scmp.eq.s32.totalorder %s14, 1
      %p86 = scmp.ne.s32.totalorder %s81, %s83
      %p87 = scmp.eq.s32.totalorder %s14, 0
      %p88 = por %p86, %p87
      %p89 = scmp.ne.s32.totalorder %s81, %s83
      %p90 = scmp.eq.s32.totalorder %s19, 1
      %p91 = por %p89, %p90
      %p92 = scmp.ne.s32.totalorder %s83, %s84
      %p93 = scmp.eq.s32.totalorder %s19, 0
      %p94 = por %p92, %p93
      %p95 = scmp.ne.s32.totalorder %s83, %s84
      %p96 = scmp.eq.s32.totalorder %s20, 1
      %p97 = por %p95, %p96
      %p99 = scmp.ne.s32.totalorder %s84, %s98
      %p100 = scmp.eq.s32.totalorder %s20, 0
      %p101 = por %p99, %p100
      %s102 = ssub.s32 %s21, %s33
      %p103 = scmp.eq.s32.totalorder %s102, 0
      %s105 = sadd.s32 %s104, 1
      %s106 = scalar_select %p103, %s104, %s105
      %p109 = pneg %p103
      %p110 = scmp.eq.s32.totalorder %s14, 1
      %p111 = por %p109, %p110
      %p112 = scmp.ne.s32.totalorder %s104, %s107
      %p113 = scmp.eq.s32.totalorder %s14, 0
      %p114 = por %p112, %p113
      %p115 = scmp.ne.s32.totalorder %s104, %s107
      %p116 = scmp.eq.s32.totalorder %s19, 1
      %p117 = por %p115, %p116
      %p118 = scmp.ne.s32.totalorder %s107, %s108
      %p119 = scmp.eq.s32.totalorder %s19, 0
      %p120 = por %p118, %p119
      %p121 = scmp.ne.s32.totalorder %s107, %s108
      %p122 = scmp.eq.s32.totalorder %s20, 1
      %p123 = por %p121, %p122
      %p125 = scmp.ne.s32.totalorder %s108, %s124
      %p126 = scmp.eq.s32.totalorder %s20, 0
      %p127 = por %p125, %p126
      %s128 = ssub.s32 %s21, %s33
      %p129 = scmp.eq.s32.totalorder %s128, 0
      %s131 = sadd.s32 %s130, 1
      %s132 = scalar_select %p129, %s130, %s131
      %p135 = pneg %p129
      %p136 = scmp.eq.s32.totalorder %s14, 1
      %p137 = por %p135, %p136
      %p138 = scmp.ne.s32.totalorder %s130, %s133
      %p139 = scmp.eq.s32.totalorder %s14, 0
      %p140 = por %p138, %p139
      %p141 = scmp.ne.s32.totalorder %s130, %s133
      %p142 = scmp.eq.s32.totalorder %s19, 1
      %p143 = por %p141, %p142
      %p144 = scmp.ne.s32.totalorder %s133, %s134
      %p145 = scmp.eq.s32.totalorder %s19, 0
      %p146 = por %p144, %p145
      %p147 = scmp.ne.s32.totalorder %s133, %s134
      %p148 = scmp.eq.s32.totalorder %s20, 1
      %p149 = por %p147, %p148
      %p151 = scmp.ne.s32.totalorder %s134, %s150
      %p152 = scmp.eq.s32.totalorder %s20, 0
      %p153 = por %p151, %p152
      %s154 = ssub.s32 %s22, %s29
      %s155 = ssub.s32 %s21, %s33
      %s156 = sor.u32 %s154, %s155
      %p157 = scmp.eq.s32.totalorder %s156, 0
      %s159 = sadd.s32 %s158, 1
      %s160 = scalar_select %p157, %s158, %s159
      %p163 = pneg %p157
      %p164 = scmp.eq.s32.totalorder %s14, 1
      %p165 = por %p163, %p164
      %p166 = scmp.ne.s32.totalorder %s158, %s161
      %p167 = scmp.eq.s32.totalorder %s14, 0
      %p168 = por %p166, %p167
      %p169 = scmp.ne.s32.totalorder %s158, %s161
      %p170 = scmp.eq.s32.totalorder %s19, 1
      %p171 = por %p169, %p170
      %p172 = scmp.ne.s32.totalorder %s161, %s162
      %p173 = scmp.eq.s32.totalorder %s19, 0
      %p174 = por %p172, %p173
      %p175 = scmp.ne.s32.totalorder %s161, %s162
      %p176 = scmp.eq.s32.totalorder %s20, 1
      %p177 = por %p175, %p176
      %p179 = scmp.ne.s32.totalorder %s162, %s178
      %p180 = scmp.eq.s32.totalorder %s20, 0
      %p181 = por %p179, %p180
      %p182 = scmp.le.s32.totalorder 1, %s14
      %p183 = scmp.lt.s32.totalorder %s14, 3
      %p184 = pnand %p182, %p183
      %p185 = pneg %p184
      // Predicated region
      $region9: #{tpu_custom_call.1} parent=5 // pred_check
        _
      $region10: #{tpu_custom_call.1} parent=5 // pred_check_branch
        %187 = sbr.rel (%p184) target = $region12
      $region11: #{tpu_custom_call.1} parent=5 // pred_region
        %s188 = ssub.s32 %s14, 1
        // Predicated region
        $region13: #{tpu_custom_call.1} parent=11 // pred_check
          %p189 = pneg %p73
        $region14: #{tpu_custom_call.1} parent=11 // pred_check_branch
          %191 = sbr.rel (%p189) target = $region16
        $region15: #{tpu_custom_call.1} parent=11 // pred_region
          _
        $region16: #{tpu_custom_call.1} parent=11 // pred_fallthru
          _
        // Predicated region
        $region17: #{tpu_custom_call.1} parent=11 // pred_check
          %p192 = pneg %p94
        $region18: #{tpu_custom_call.1} parent=11 // pred_check_branch
          %194 = sbr.rel (%p192) target = $region20
        $region19: #{tpu_custom_call.1} parent=11 // pred_region
          _
        $region20: #{tpu_custom_call.1} parent=11 // pred_fallthru
          _
        // Predicated region
        $region21: #{tpu_custom_call.1} parent=11 // pred_check
          %p195 = pneg %p120
        $region22: #{tpu_custom_call.1} parent=11 // pred_check_branch
          %197 = sbr.rel (%p195) target = $region24
        $region23: #{tpu_custom_call.1} parent=11 // pred_region
          %p198 = scmp.lt.s32.totalorder %s23, 0
          %s199 = scalar_select %p198, %s23, 0
          %s200 = smul.addr %s199, 8
          %s201 = scalar_lea.vmem %s3, %s200
        $region24: #{tpu_custom_call.1} parent=11 // pred_fallthru
          _
        // Predicated region
        $region25: #{tpu_custom_call.1} parent=11 // pred_check
          %p202 = pneg %p146
        $region26: #{tpu_custom_call.1} parent=11 // pred_check_branch
          %204 = sbr.rel (%p202) target = $region28
        $region27: #{tpu_custom_call.1} parent=11 // pred_region
          %p205 = scmp.lt.s32.totalorder %s23, 0
          %s206 = scalar_select %p205, %s23, 0
          %s207 = scalar_lea.vmem %s4, %s206
        $region28: #{tpu_custom_call.1} parent=11 // pred_fallthru
          _
      $region12: #{tpu_custom_call.1} parent=5 // pred_fallthru
        _
      %p208 = scmp.lt.s32.totalorder %s14, 2
      // Predicated region
      $region29: #{tpu_custom_call.1} parent=5 // pred_check
        %p209 = pneg %p208
      $region30: #{tpu_custom_call.1} parent=5 // pred_check_branch
        %211 = sbr.rel (%p209) target = $region32
      $region31: #{tpu_custom_call.1} parent=5 // pred_region
        // Predicated region
        $region33: #{tpu_custom_call.1} parent=31 // pred_check
          %p212 = pneg %p46
        $region34: #{tpu_custom_call.1} parent=31 // pred_check_branch
          %214 = sbr.rel (%p212) target = $region36
        $region35: #{tpu_custom_call.1} parent=31 // pred_region
          %p215 = scmp.lt.s32.totalorder %s22, 1
          %s216 = scalar_select %p215, %s22, 1
          %s217 = smul.addr %s216, 8
          %s218 = scalar_lea.vmem %s0, %s217
        $region36: #{tpu_custom_call.1} parent=31 // pred_fallthru
          _
      $region32: #{tpu_custom_call.1} parent=5 // pred_fallthru
        _
      %p219 = scmp.le.s32.totalorder 1, %s14
      %p220 = scmp.lt.s32.totalorder %s14, 3
      %p221 = pnand %p219, %p220
      %p222 = pneg %p221
      // Predicated region
      $region37: #{tpu_custom_call.1} parent=5 // pred_check
        _
      $region38: #{tpu_custom_call.1} parent=5 // pred_check_branch
        %224 = sbr.rel (%p221) target = $region40
      $region39: #{tpu_custom_call.1} parent=5 // pred_region
        %s225 = ssub.s32 %s14, 1
        %p226 = scmp.lt.s32.totalorder %s24, 1
        %s227 = scalar_select %p226, %s24, 1
        %s228 = smul.addr %s227, 8
        %s229 = scalar_lea.vmem %s0, %s228
        %p230 = pneg %p52
        %p231 = pneg %p49
        %p232 = pneg %p73
        %p233 = pneg %p70
        %p234 = pneg %p94
        %p235 = pneg %p91
        %p236 = scmp.lt.s32.totalorder %s23, 0
        %s237 = scalar_select %p236, %s23, 0
        %s238 = smul.addr %s237, 8
        %s239 = scalar_lea.vmem %s3, %s238
        %p240 = pneg %p120
        %p241 = pneg %p117
        %p242 = scmp.lt.s32.totalorder %s23, 0
        %s243 = scalar_select %p242, %s23, 0
        %s244 = scalar_lea.vmem %s4, %s243
        %p245 = pneg %p146
        %p246 = pneg %p143
        %p247 = pneg %p174
        %p248 = pneg %p171
        %s249 = sand.u32 %s161, 1
        %s250 = scalar_lea.sflag [#allocation3], %s249
        %s251 = sand.u32 %s161, 1
        %s252 = smul.addr %s251, 8
        %s253 = scalar_lea.vmem [#allocation2], %s252
        %p254 = scmp.lt.s32.totalorder %s24, 1
        %s255 = scalar_select %p254, %s24, 1
        %s256 = smul.addr %s255, 8
        %s257 = scalar_lea.vmem %s0, %s256
        %p258 = scmp.lt.s32.totalorder %s23, 0
        %s259 = scalar_select %p258, %s23, 0
        %s260 = smul.addr %s259, 8
        %s261 = scalar_lea.vmem %s3, %s260
        %p262 = scmp.lt.s32.totalorder %s23, 0
        %s263 = scalar_select %p262, %s23, 0
        %s264 = scalar_lea.vmem %s4, %s263
        %v265 = vld [vmem:[%s257] sm:$0xff]
        %vm266 = vcmask 261120
        %v267 = vsel %vm266, %v265, 0.0
        %268 = vadd.xlane.f32.xlu0 %v267
        %v269 = vpop.xlane.xlu0 %268
        %v270 = vrcp.pop 32.0
        %v271 = vmul.f32 %v269, %v270
        %v272 = vsub.f32 %v265, %v271
        %v273 = vmul.f32 %v272, %v272
        %v274 = vsel %vm266, %v273, 0.0
        %275 = vadd.xlane.f32.xlu0 %v274
        %v276 = vpop.xlane.xlu0 %275
        %v277 = vmul.f32 %v276, %v270
        %v278 = vadd.f32 %v277, 1e-06
        %v279 = vrsqrt.pop %v278
        %v280 = vmul.f32 %v272, %v279
        %v281 = vld [vmem:[%s1] sm:$0x1]
        %v283 = vlaneseq
        %v284 = vshrl.u32 %v283, 7
        %v285 = vsub.s32 0, %v284
        %v286 = vrot.slane %v281, %v285
        %v288 = vmul.f32 %v280, %v286
        %v289 = vld [vmem:[%s2] sm:$0x1]
        %v291 = vlaneseq
        %v292 = vshrl.u32 %v291, 7
        %v293 = vsub.s32 0, %v292
        %v294 = vrot.slane %v289, %v293
        %v296 = vadd.f32 %v288, %v294
        %v297 = vld [vmem:[%s261] sm:$0xff]
        %v298 = vld [vmem:[%s261 + $0x8] sm:$0xff]
        %v299 = vld [vmem:[%s261 + $0x10] sm:$0xff]
        %v300 = vld [vmem:[%s261 + $0x18] sm:$0xff]
        %v301 = vld [vmem:[%s264] sm:$0x1]
        %v303 = vlaneseq
        %v304 = vshrl.u32 %v303, 7
        %v305 = vsub.s32 0, %v304
        %v306 = vrot.slane %v301, %v305
        %v309 = vsel %vm266, %v296, 0
        %311 = vmatprep.subr.mxu0 0.0
        %312 = vmatpush1.msra.mxu0 %v297
        %313 = vmatprep.subr.mxu0 0.0
        %314 = vmatpush1.msra.mxu0 %v298
        %315 = vmatprep.subr.mxu0 0.0
        %316 = vmatpush1.msra.mxu0 %v299
        %317 = vmatprep.subr.mxu0 0.0
        %318 = vmatpush1.msra.mxu0 %v300
        %319 = vmatprep.subr.mxu0 0.0
        %320 = vmatpush1.msra.mxu0 0.0
        %321 = vmatprep.subr.mxu0 0.0
        %322 = vmatpush1.msra.mxu0 0.0
        %323 = vmatprep.subr.mxu0 0.0
        %324 = vmatpush1.msra.mxu0 0.0
        %325 = vmatprep.subr.mxu0 0.0
        %326 = vmatpush1.msra.mxu0 0.0
        %327 = vmatprep.subr.mxu0 0.0
        %328 = vmatpush1.msra.mxu0 0.0
        %329 = vmatprep.subr.mxu0 0.0
        %330 = vmatpush1.msra.mxu0 0.0
        %331 = vmatprep.subr.mxu0 0.0
        %332 = vmatpush1.msra.mxu0 0.0
        %333 = vmatprep.subr.mxu0 0.0
        %334 = vmatpush1.msra.mxu0 0.0
        %335 = vmatprep.subr.mxu0 0.0
        %336 = vmatpush1.msra.mxu0 0.0
        %337 = vmatprep.subr.mxu0 0.0
        %338 = vmatpush1.msra.mxu0 0.0
        %339 = vmatprep.subr.mxu0 0.0
        %340 = vmatpush1.msra.mxu0 0.0
        %341 = vmatprep.subr.mxu0 0.0
        %342 = vmatpush1.msra.mxu0 0.0
        %343 = vmatprep.subr.mxu0 0.0
        %344 = vmatpush1.msra.mxu0 0.0
        %345 = vmatprep.subr.mxu0 0.0
        %346 = vmatpush1.msra.mxu0 0.0
        %347 = vmatprep.subr.mxu0 0.0
        %348 = vmatpush1.msra.mxu0 0.0
        %349 = vmatprep.subr.mxu0 0.0
        %350 = vmatpush1.msra.mxu0 0.0
        %351 = vmatprep.subr.mxu0 0.0
        %352 = vmatpush1.msra.mxu0 0.0
        %353 = vmatprep.subr.mxu0 0.0
        %354 = vmatpush1.msra.mxu0 0.0
        %355 = vmatprep.subr.mxu0 0.0
        %356 = vmatpush1.msra.mxu0 0.0
        %357 = vmatprep.subr.mxu0 0.0
        %358 = vmatpush1.msra.mxu0 0.0
        %359 = vmatprep.subr.mxu0 0.0
        %360 = vmatpush1.msra.mxu0 0.0
        %361 = vmatprep.subr.mxu0 0.0
        %362 = vmatpush1.msra.mxu0 0.0
        %363 = vmatprep.subr.mxu0 0.0
        %364 = vmatpush1.msra.mxu0 0.0
        %365 = vmatprep.subr.mxu0 0.0
        %366 = vmatpush1.msra.mxu0 0.0
        %367 = vmatprep.subr.mxu0 0.0
        %368 = vmatpush1.msra.mxu0 0.0
        %369 = vmatprep.subr.mxu0 0.0
        %370 = vmatpush1.msra.mxu0 0.0
        %371 = vmatprep.subr.mxu0 0.0
        %372 = vmatpush1.msra.mxu0 0.0
        %373 = vmatprep.subr.mxu0 0.0
        %374 = vmatpush1.msra.mxu0 0.0
        %375 = vmatprep.mubr.f32.mxu0 0.0
        %376 = vmatmul.mubr.f32.gmra.mrb[0].mxu0 %v309
        %v377 = vpop.f32.mrb[0].mxu0
        %v378 = vadd.f32 %v306, %v377
        %v379 = vpop.f32.mrb[0].mxu0
        %380 = vdwg.mxu0
        %vm381 = vcmask 130048
        %382 = vst.msk [vmem:[%s253] sm:$0xff] %vm381, %v378
        %s383 = sand.u32 %s161, 1
        %s384 = scalar_lea.sflag [#allocation3], %s383
        %s385 = sand.u32 %s161, 1
        %s386 = smul.addr %s385, 8
        %s387 = scalar_lea.vmem [#allocation2], %s386
        // Predicated region
        $region41: #{tpu_custom_call.1} parent=39 // pred_check
          %p388 = pneg %p171
        $region42: #{tpu_custom_call.1} parent=39 // pred_check_branch
          %390 = sbr.rel (%p388) target = $region44
        $region43: #{tpu_custom_call.1} parent=39 // pred_region
          %s392 = ssub.s32 128, 128
          %393 = vsyncadd %s384, %s392
          %s394 = sadd.s32 %s23, %s24
          %s395 = smul.addr %s394, 128
          %s396 = scalar_lea.hbm %s5, %s395
          %s398 = sshll.u32 %s387, 4
          %s399 = int_to_ptr.vmem [resolvable:$true] %s398
          %401 = dma.vmem_to_hbm [thread:$0]  %s399, 128, %s396, %s384
        $region44: #{tpu_custom_call.1} parent=39 // pred_fallthru
          _
      $region40: #{tpu_custom_call.1} parent=5 // pred_fallthru
        _
      %p402 = scmp.le.s32.totalorder 2, %s14
      // Predicated region
      $region45: #{tpu_custom_call.1} parent=5 // pred_check
        %p403 = pneg %p402
      $region46: #{tpu_custom_call.1} parent=5 // pred_check_branch
        %405 = sbr.rel (%p403) target = $region48
      $region47: #{tpu_custom_call.1} parent=5 // pred_region
        %s406 = ssub.s32 %s14, 2
        // Predicated region
        $region49: #{tpu_custom_call.1} parent=47 // pred_check
          %p407 = pneg %p177
        $region50: #{tpu_custom_call.1} parent=47 // pred_check_branch
          %409 = sbr.rel (%p407) target = $region52
        $region51: #{tpu_custom_call.1} parent=47 // pred_region
          %s410 = sand.u32 %s162, 1
          %s411 = scalar_lea.sflag [#allocation3], %s410
          %s412 = sand.u32 %s162, 1
          %s413 = smul.addr %s412, 8
          %s414 = scalar_lea.vmem [#allocation2], %s413
          %415 = dma.done %s411, 128
        $region52: #{tpu_custom_call.1} parent=47 // pred_fallthru
          _
      $region48: #{tpu_custom_call.1} parent=5 // pred_fallthru
        _
    $region6: #{tpu_custom_call.1} parent=1 // loop_footer
      %s18 = sadd.s32 1, %s14
    $region7: #{tpu_custom_call.1} parent=1 // loop_footer_branch
      %13 = sbr.rel target = $region3
    $region8: #{tpu_custom_call.1} parent=1 // loop_exit
      _
    %416 = vsyncpa [#allocation3], 1
    %s417 = scalar_lea.sflag [#allocation3], 1
    %418 = vsyncpa %s417, 1

</llo_original>
